<compile_context>
chip_gen: v5e
topology: v5e:2x2
jax: 0.10.0
libtpu: 0.0.40
codegen_flags: <defaults>
</compile_context>

<pallas_src>
import functools

import jax
import jax.numpy as jnp
from jax import lax
from jax.experimental import pallas as pl
from jax.experimental.pallas import tpu as pltpu


# ---------------------------------------------------------------------------
# Fused kernel.  Grid = (phase, sample):
#   phase 0: conv -> merge per-channel (mean, M2) into persistent VMEM scratch.
#   phase 1: conv recomputed -> y * scale + shift -> ReLU -> store.
#
#   x_ref : (3*stride, 1, Cin, Hq*Wo)  stride-phase planes, spatial flattened
#   w_ref : (9, Cout, Cin)             per-tap conv weights
#   g_ref : (Cout, 1)  BN gamma        b_ref : (Cout, 1)  BN beta
#   o_ref : (1, Cout, Ho*Wo)           per-sample output, channel-major
#   mean_acc, m2_acc : (Cout, 1) VMEM scratch, persistent across the grid
# ---------------------------------------------------------------------------
def _single_conv_kernel(x_ref, w_ref, g_ref, b_ref, o_ref, mean_acc, m2_acc,
                        *, stride, ho, wo, m_total, eps):
    phase = pl.program_id(0)
    n = pl.program_id(1)
    L = ho * wo

    # ---- conv: 9 accumulated MXU matmuls over unit-stride tap slices -------
    acc = jnp.zeros(o_ref.shape[1:], dtype=jnp.float32)          # (Cout, L)
    for kh in range(3):
        for kw in range(3):
            plane = kw * stride + (kh % stride)                  # static
            row0 = (kh // stride) * wo                           # static
            rhs = x_ref[plane, 0, :, row0:row0 + L]              # (Cin, L)
            acc = acc + jnp.dot(w_ref[kh * 3 + kw], rhs,
                                preferred_element_type=jnp.float32)

    # ---- phase 0: accumulate per-channel batch statistics ------------------
    @pl.when(jnp.logical_and(phase == 0, n == 0))
    def _init():
        mean_acc[...] = jnp.zeros_like(mean_acc)
        m2_acc[...] = jnp.zeros_like(m2_acc)

    @pl.when(phase == 0)
    def _stats():
        # Per-block two-pass (mean, centered SS) merged with Chan's update:
        # numerically robust vs. the one-pass E[y^2] - E[y]^2 form.
        bsz = float(L)
        cnt_old = (n * L).astype(jnp.float32)
        cnt_new = cnt_old + bsz
        bmean = jnp.mean(acc, axis=1, keepdims=True)              # (Cout, 1)
        bm2 = jnp.sum((acc - bmean) ** 2, axis=1, keepdims=True)  # (Cout, 1)
        delta = bmean - mean_acc[...]
        mean_acc[...] = mean_acc[...] + delta * (bsz / cnt_new)
        m2_acc[...] = (m2_acc[...] + bm2
                       + (delta * delta) * (cnt_old * bsz / cnt_new))

    # ---- phase 1: fold BN into one per-channel FMA + ReLU, store ------------
    @pl.when(phase == 1)
    def _normalize():
        mean = mean_acc[...]
        var = jnp.maximum(m2_acc[...] * (1.0 / float(m_total)), 0.0)  # biased
        # Per-channel-only work (one rsqrt per step); no per-element broadcast
        # bloat beyond the single fused FMA + ReLU below.
        scale = g_ref[...] * lax.rsqrt(var + eps)
        shift = b_ref[...] - mean * scale
        o_ref[0] = jnp.maximum(acc * scale + shift, 0.0)


# ---------------------------------------------------------------------------
# Wrapper: NCHW in / NCHW out, PyTorch parameter layout (OIHW weight).
# ---------------------------------------------------------------------------
def single_conv_forward(x_nchw, w_oihw, bias, gamma, beta, stride, eps=1e-5):
    # `bias` is intentionally unused: training-mode BatchNorm subtracts the
    # per-channel batch mean, which cancels a constant per-channel bias exactly.
    # TODO(synk): eval-mode BN (running_mean/var) would need the bias and the
    #   stored statistics; only the train-mode forward (the module default) is
    #   implemented here.
    del bias

    N, Cin, H, W = x_nchw.shape
    Cout = w_oihw.shape[0]
    s = int(stride)
    Ho = (H - 1) // s + 1          # kernel 3, pad 1, stride s
    Wo = (W - 1) // s + 1
    L = Ho * Wo
    M = N * L

    # Stride-phase decomposition of the zero-padded input (~3/s x input bytes,
    # pure layout plumbing that XLA fuses with the pad; NOT the 9x im2col):
    #   planes[kw*s + ph][n, c, r, w] = x_pad[n, c, ph + s*r, kw + s*w]
    # so tap (kh, kw) is the unit-stride row window [kh//s, kh//s + Ho) of
    # plane (kw*s + kh % s), already channel-major with lane-flattened spatial.
    qmax = 2 // s
    Hq = Ho + qmax
    pad_bottom = max(1, s * Hq - H - 1)      # extra zero rows are never read
    x_pad = jnp.pad(x_nchw.astype(jnp.float32),
                    ((0, 0), (0, 0), (1, pad_bottom), (1, 1)))
    planes = jnp.stack(
        [x_pad[:, :, ph:ph + s * (Hq - 1) + 1:s, kw:kw + s * (Wo - 1) + 1:s]
         for kw in range(3) for ph in range(s)],
        axis=0)                                        # (3s, N, Cin, Hq, Wo)
    planes = planes.reshape(3 * s, N, Cin, Hq * Wo)

    # Per-tap weights (Cout, Cin); tap index = kh*3 + kw.
    w_taps = jnp.transpose(w_oihw.astype(jnp.float32), (2, 3, 0, 1))
    w_taps = w_taps.reshape(9, Cout, Cin)
    g2 = gamma.reshape(Cout, 1).astype(jnp.float32)
    b2 = beta.reshape(Cout, 1).astype(jnp.float32)

    kernel = functools.partial(_single_conv_kernel, stride=s, ho=Ho, wo=Wo,
                               m_total=M, eps=float(eps))

    out = pl.pallas_call(
        kernel,
        out_shape=jax.ShapeDtypeStruct((N, Cout, L), jnp.float32),
        grid=(2, N),                       # (stats/normalize phase, sample)
        in_specs=[
            pl.BlockSpec((3 * s, 1, Cin, Hq * Wo), lambda ph, n: (0, n, 0, 0)),
            pl.BlockSpec((9, Cout, Cin), lambda ph, n: (0, 0, 0)),
            pl.BlockSpec((Cout, 1), lambda ph, n: (0, 0)),
            pl.BlockSpec((Cout, 1), lambda ph, n: (0, 0)),
        ],
        # During the stats phase every step maps to block 0; it stays resident
        # and is fully overwritten at (phase=1, n=0) before its only writeback,
        # so phase 0 produces no spurious HBM output traffic.
        out_specs=pl.BlockSpec((1, Cout, L), lambda ph, n: (ph * n, 0, 0)),
        scratch_shapes=[pltpu.VMEM((Cout, 1), jnp.float32),   # running mean
                        pltpu.VMEM((Cout, 1), jnp.float32)],  # running M2
        compiler_params=pltpu.CompilerParams(
            dimension_semantics=("arbitrary", "arbitrary")),
    )(planes, w_taps, g2, b2)

    # (N, Cout, Ho*Wo) -> (N, Cout, Ho, Wo): metadata-only reshape.
    return out.reshape(N, Cout, Ho, Wo)


# ---------------------------------------------------------------------------
# Pure-JAX reference (NCHW, keeps the conv bias), used only for validation.
# ---------------------------------------------------------------------------
def reference(x_nchw, w_oihw, bias, gamma, beta, stride, eps=1e-5):
    y = lax.conv_general_dilated(
        x_nchw.astype(jnp.float32), w_oihw.astype(jnp.float32),
        window_strides=(stride, stride), padding=((1, 1), (1, 1)),
        dimension_numbers=("NCHW", "OIHW", "NCHW"))
    y = y + bias.reshape(1, -1, 1, 1)
    mean = jnp.mean(y, axis=(0, 2, 3), keepdims=True)
    var = jnp.mean((y - mean) ** 2, axis=(0, 2, 3), keepdims=True)
    y = (y - mean) * lax.rsqrt(var + eps)
    y = y * gamma.reshape(1, -1, 1, 1) + beta.reshape(1, -1, 1, 1)
    return jnp.maximum(y, 0.0)


if __name__ == "__main__":
    # SingleConv(inchannel=4, outchannel=8, s=2)
    N, Cin, Cout, H, W, stride = 2, 4, 8, 16, 16, 2

    key = jax.random.PRNGKey(0)
    kx, kw, kb = jax.random.split(key, 3)
    x = jax.random.normal(kx, (N, Cin, H, W), dtype=jnp.float32)
    w = jax.random.normal(kw, (Cout, Cin, 3, 3), dtype=jnp.float32) * 0.1
    bias = jax.random.normal(kb, (Cout,), dtype=jnp.float32) * 0.1
    gamma = jnp.ones((Cout,), jnp.float32)   # nn.BatchNorm2d default init
    beta = jnp.zeros((Cout,), jnp.float32)

    out = single_conv_forward(x, w, bias, gamma, beta, stride)
    out = jax.block_until_ready(out)

    ref = jax.block_until_ready(reference(x, w, bias, gamma, beta, stride))
    Ho = (H - 1) // stride + 1
    Wo = (W - 1) // stride + 1
    assert out.shape == (N, Cout, Ho, Wo)
    assert jnp.allclose(out, ref, atol=1e-4, rtol=1e-4), "mismatch vs reference"

    print("KERNEL_OK")
</pallas_src>

<mosaic_0001>
module attributes {stable_mosaic.version = 11 : i64} {
  func.func @_single_conv_kernel(%arg0: i32, %arg1: i32, %arg2: memref<6x1x4x72xf32, #tpu.memory_space<vmem>>, %arg3: memref<9x8x4xf32, #tpu.memory_space<vmem>>, %arg4: memref<8x1xf32, #tpu.memory_space<vmem>>, %arg5: memref<8x1xf32, #tpu.memory_space<vmem>>, %arg6: memref<1x8x64xf32, #tpu.memory_space<vmem>>, %arg7: memref<8x1xf32, #tpu.memory_space<vmem>>, %arg8: memref<8x1xf32, #tpu.memory_space<vmem>>) attributes {dimension_semantics = [#tpu.dimension_semantics<arbitrary>, #tpu.dimension_semantics<arbitrary>], iteration_bounds = array<i64: 2, 2>, scalar_prefetch = 0 : i64, scratch_operands = 2 : i64, tpu.core_type = #tpu.core_type<tc>, window_params = [{transform_indices = @transform_0, window_bounds = array<i64: 6, 1, 4, 72>}, {pipeline_mode = #tpu.pipeline_mode<synchronous>, transform_indices = @transform_1, window_bounds = array<i64: 9, 8, 4>}, {pipeline_mode = #tpu.pipeline_mode<synchronous>, transform_indices = @transform_2, window_bounds = array<i64: 8, 1>}, {pipeline_mode = #tpu.pipeline_mode<synchronous>, transform_indices = @transform_3, window_bounds = array<i64: 8, 1>}, {transform_indices = @transform_4, window_bounds = array<i64: 1, 8, 64>}]} {
    %cst = arith.constant 0.000000e+00 : f32
    %0 = vector.broadcast %cst : f32 to vector<8x64xf32>
    %c0 = arith.constant 0 : index
    %c0_0 = arith.constant 0 : index
    %c0_1 = arith.constant 0 : index
    %c0_2 = arith.constant 0 : index
    %1 = vector.load %arg2[%c0, %c0_0, %c0_1, %c0_2] : memref<6x1x4x72xf32, #tpu.memory_space<vmem>>, vector<1x1x4x64xf32>
    %2 = vector.shape_cast %1 : vector<1x1x4x64xf32> to vector<4x64xf32>
    %c0_3 = arith.constant 0 : index
    %c0_4 = arith.constant 0 : index
    %c0_5 = arith.constant 0 : index
    %3 = vector.load %arg3[%c0_3, %c0_4, %c0_5] : memref<9x8x4xf32, #tpu.memory_space<vmem>>, vector<1x8x4xf32>
    %4 = vector.shape_cast %3 : vector<1x8x4xf32> to vector<8x4xf32>
    %cst_6 = arith.constant dense<0.000000e+00> : vector<8x64xf32>
    %5 = tpu.matmul %4, %2, %cst_6 {dimension_numbers = #tpu.dot_dimension_numbers<[1], [0], [0], [1], [0, 0, 1, 1], [], []>} : vector<8x4xf32>, vector<4x64xf32>, vector<8x64xf32> -> vector<8x64xf32>
    %6 = arith.addf %0, %5 : vector<8x64xf32>
    %c2 = arith.constant 2 : index
    %c0_7 = arith.constant 0 : index
    %c0_8 = arith.constant 0 : index
    %c0_9 = arith.constant 0 : index
    %7 = vector.load %arg2[%c2, %c0_7, %c0_8, %c0_9] : memref<6x1x4x72xf32, #tpu.memory_space<vmem>>, vector<1x1x4x64xf32>
    %8 = vector.shape_cast %7 : vector<1x1x4x64xf32> to vector<4x64xf32>
    %c1 = arith.constant 1 : index
    %c0_10 = arith.constant 0 : index
    %c0_11 = arith.constant 0 : index
    %9 = vector.load %arg3[%c1, %c0_10, %c0_11] : memref<9x8x4xf32, #tpu.memory_space<vmem>>, vector<1x8x4xf32>
    %10 = vector.shape_cast %9 : vector<1x8x4xf32> to vector<8x4xf32>
    %cst_12 = arith.constant dense<0.000000e+00> : vector<8x64xf32>
    %11 = tpu.matmul %10, %8, %cst_12 {dimension_numbers = #tpu.dot_dimension_numbers<[1], [0], [0], [1], [0, 0, 1, 1], [], []>} : vector<8x4xf32>, vector<4x64xf32>, vector<8x64xf32> -> vector<8x64xf32>
    %12 = arith.addf %6, %11 : vector<8x64xf32>
    %c4 = arith.constant 4 : index
    %c0_13 = arith.constant 0 : index
    %c0_14 = arith.constant 0 : index
    %c0_15 = arith.constant 0 : index
    %13 = vector.load %arg2[%c4, %c0_13, %c0_14, %c0_15] : memref<6x1x4x72xf32, #tpu.memory_space<vmem>>, vector<1x1x4x64xf32>
    %14 = vector.shape_cast %13 : vector<1x1x4x64xf32> to vector<4x64xf32>
    %c2_16 = arith.constant 2 : index
    %c0_17 = arith.constant 0 : index
    %c0_18 = arith.constant 0 : index
    %15 = vector.load %arg3[%c2_16, %c0_17, %c0_18] : memref<9x8x4xf32, #tpu.memory_space<vmem>>, vector<1x8x4xf32>
    %16 = vector.shape_cast %15 : vector<1x8x4xf32> to vector<8x4xf32>
    %cst_19 = arith.constant dense<0.000000e+00> : vector<8x64xf32>
    %17 = tpu.matmul %16, %14, %cst_19 {dimension_numbers = #tpu.dot_dimension_numbers<[1], [0], [0], [1], [0, 0, 1, 1], [], []>} : vector<8x4xf32>, vector<4x64xf32>, vector<8x64xf32> -> vector<8x64xf32>
    %18 = arith.addf %12, %17 : vector<8x64xf32>
    %c1_20 = arith.constant 1 : index
    %c0_21 = arith.constant 0 : index
    %c0_22 = arith.constant 0 : index
    %c0_23 = arith.constant 0 : index
    %19 = vector.load %arg2[%c1_20, %c0_21, %c0_22, %c0_23] : memref<6x1x4x72xf32, #tpu.memory_space<vmem>>, vector<1x1x4x64xf32>
    %20 = vector.shape_cast %19 : vector<1x1x4x64xf32> to vector<4x64xf32>
    %c3 = arith.constant 3 : index
    %c0_24 = arith.constant 0 : index
    %c0_25 = arith.constant 0 : index
    %21 = vector.load %arg3[%c3, %c0_24, %c0_25] : memref<9x8x4xf32, #tpu.memory_space<vmem>>, vector<1x8x4xf32>
    %22 = vector.shape_cast %21 : vector<1x8x4xf32> to vector<8x4xf32>
    %cst_26 = arith.constant dense<0.000000e+00> : vector<8x64xf32>
    %23 = tpu.matmul %22, %20, %cst_26 {dimension_numbers = #tpu.dot_dimension_numbers<[1], [0], [0], [1], [0, 0, 1, 1], [], []>} : vector<8x4xf32>, vector<4x64xf32>, vector<8x64xf32> -> vector<8x64xf32>
    %24 = arith.addf %18, %23 : vector<8x64xf32>
    %c3_27 = arith.constant 3 : index
    %c0_28 = arith.constant 0 : index
    %c0_29 = arith.constant 0 : index
    %c0_30 = arith.constant 0 : index
    %25 = vector.load %arg2[%c3_27, %c0_28, %c0_29, %c0_30] : memref<6x1x4x72xf32, #tpu.memory_space<vmem>>, vector<1x1x4x64xf32>
    %26 = vector.shape_cast %25 : vector<1x1x4x64xf32> to vector<4x64xf32>
    %c4_31 = arith.constant 4 : index
    %c0_32 = arith.constant 0 : index
    %c0_33 = arith.constant 0 : index
    %27 = vector.load %arg3[%c4_31, %c0_32, %c0_33] : memref<9x8x4xf32, #tpu.memory_space<vmem>>, vector<1x8x4xf32>
    %28 = vector.shape_cast %27 : vector<1x8x4xf32> to vector<8x4xf32>
    %cst_34 = arith.constant dense<0.000000e+00> : vector<8x64xf32>
    %29 = tpu.matmul %28, %26, %cst_34 {dimension_numbers = #tpu.dot_dimension_numbers<[1], [0], [0], [1], [0, 0, 1, 1], [], []>} : vector<8x4xf32>, vector<4x64xf32>, vector<8x64xf32> -> vector<8x64xf32>
    %30 = arith.addf %24, %29 : vector<8x64xf32>
    %c5 = arith.constant 5 : index
    %c0_35 = arith.constant 0 : index
    %c0_36 = arith.constant 0 : index
    %c0_37 = arith.constant 0 : index
    %31 = vector.load %arg2[%c5, %c0_35, %c0_36, %c0_37] : memref<6x1x4x72xf32, #tpu.memory_space<vmem>>, vector<1x1x4x64xf32>
    %32 = vector.shape_cast %31 : vector<1x1x4x64xf32> to vector<4x64xf32>
    %c5_38 = arith.constant 5 : index
    %c0_39 = arith.constant 0 : index
    %c0_40 = arith.constant 0 : index
    %33 = vector.load %arg3[%c5_38, %c0_39, %c0_40] : memref<9x8x4xf32, #tpu.memory_space<vmem>>, vector<1x8x4xf32>
    %34 = vector.shape_cast %33 : vector<1x8x4xf32> to vector<8x4xf32>
    %cst_41 = arith.constant dense<0.000000e+00> : vector<8x64xf32>
    %35 = tpu.matmul %34, %32, %cst_41 {dimension_numbers = #tpu.dot_dimension_numbers<[1], [0], [0], [1], [0, 0, 1, 1], [], []>} : vector<8x4xf32>, vector<4x64xf32>, vector<8x64xf32> -> vector<8x64xf32>
    %36 = arith.addf %30, %35 : vector<8x64xf32>
    %c0_42 = arith.constant 0 : index
    %c0_43 = arith.constant 0 : index
    %c0_44 = arith.constant 0 : index
    %c8 = arith.constant 8 : index
    %37 = vector.load %arg2[%c0_42, %c0_43, %c0_44, %c8] : memref<6x1x4x72xf32, #tpu.memory_space<vmem>>, vector<1x1x4x64xf32>
    %38 = vector.shape_cast %37 : vector<1x1x4x64xf32> to vector<4x64xf32>
    %c6 = arith.constant 6 : index
    %c0_45 = arith.constant 0 : index
    %c0_46 = arith.constant 0 : index
    %39 = vector.load %arg3[%c6, %c0_45, %c0_46] : memref<9x8x4xf32, #tpu.memory_space<vmem>>, vector<1x8x4xf32>
    %40 = vector.shape_cast %39 : vector<1x8x4xf32> to vector<8x4xf32>
    %cst_47 = arith.constant dense<0.000000e+00> : vector<8x64xf32>
    %41 = tpu.matmul %40, %38, %cst_47 {dimension_numbers = #tpu.dot_dimension_numbers<[1], [0], [0], [1], [0, 0, 1, 1], [], []>} : vector<8x4xf32>, vector<4x64xf32>, vector<8x64xf32> -> vector<8x64xf32>
    %42 = arith.addf %36, %41 : vector<8x64xf32>
    %c2_48 = arith.constant 2 : index
    %c0_49 = arith.constant 0 : index
    %c0_50 = arith.constant 0 : index
    %c8_51 = arith.constant 8 : index
    %43 = vector.load %arg2[%c2_48, %c0_49, %c0_50, %c8_51] : memref<6x1x4x72xf32, #tpu.memory_space<vmem>>, vector<1x1x4x64xf32>
    %44 = vector.shape_cast %43 : vector<1x1x4x64xf32> to vector<4x64xf32>
    %c7 = arith.constant 7 : index
    %c0_52 = arith.constant 0 : index
    %c0_53 = arith.constant 0 : index
    %45 = vector.load %arg3[%c7, %c0_52, %c0_53] : memref<9x8x4xf32, #tpu.memory_space<vmem>>, vector<1x8x4xf32>
    %46 = vector.shape_cast %45 : vector<1x8x4xf32> to vector<8x4xf32>
    %cst_54 = arith.constant dense<0.000000e+00> : vector<8x64xf32>
    %47 = tpu.matmul %46, %44, %cst_54 {dimension_numbers = #tpu.dot_dimension_numbers<[1], [0], [0], [1], [0, 0, 1, 1], [], []>} : vector<8x4xf32>, vector<4x64xf32>, vector<8x64xf32> -> vector<8x64xf32>
    %48 = arith.addf %42, %47 : vector<8x64xf32>
    %c4_55 = arith.constant 4 : index
    %c0_56 = arith.constant 0 : index
    %c0_57 = arith.constant 0 : index
    %c8_58 = arith.constant 8 : index
    %49 = vector.load %arg2[%c4_55, %c0_56, %c0_57, %c8_58] : memref<6x1x4x72xf32, #tpu.memory_space<vmem>>, vector<1x1x4x64xf32>
    %50 = vector.shape_cast %49 : vector<1x1x4x64xf32> to vector<4x64xf32>
    %c8_59 = arith.constant 8 : index
    %c0_60 = arith.constant 0 : index
    %c0_61 = arith.constant 0 : index
    %51 = vector.load %arg3[%c8_59, %c0_60, %c0_61] : memref<9x8x4xf32, #tpu.memory_space<vmem>>, vector<1x8x4xf32>
    %52 = vector.shape_cast %51 : vector<1x8x4xf32> to vector<8x4xf32>
    %cst_62 = arith.constant dense<0.000000e+00> : vector<8x64xf32>
    %53 = tpu.matmul %52, %50, %cst_62 {dimension_numbers = #tpu.dot_dimension_numbers<[1], [0], [0], [1], [0, 0, 1, 1], [], []>} : vector<8x4xf32>, vector<4x64xf32>, vector<8x64xf32> -> vector<8x64xf32>
    %54 = arith.addf %48, %53 : vector<8x64xf32>
    %c0_i32 = arith.constant 0 : i32
    %55 = arith.cmpi eq, %arg0, %c0_i32 : i32
    %c0_i32_63 = arith.constant 0 : i32
    %56 = arith.cmpi eq, %arg1, %c0_i32_63 : i32
    %57 = arith.andi %55, %56 : i1
    %58 = arith.extui %57 : i1 to i32
    %c0_i32_64 = arith.constant 0 : i32
    %59 = arith.cmpi ne, %58, %c0_i32_64 : i32
    scf.if %59 {
      %cst_68 = arith.constant 0.000000e+00 : f32
      %66 = vector.broadcast %cst_68 : f32 to vector<8x1xf32>
      %c0_69 = arith.constant 0 : index
      %c0_70 = arith.constant 0 : index
      %67 = vector.load %arg7[%c0_69, %c0_70] : memref<8x1xf32, #tpu.memory_space<vmem>>, vector<8x1xf32>
      tpu.vector_store %arg7[%c0_69, %c0_70], %66 {strides = array<i32>} : memref<8x1xf32, #tpu.memory_space<vmem>>, vector<8x1xf32>,
      %cst_71 = arith.constant 0.000000e+00 : f32
      %68 = vector.broadcast %cst_71 : f32 to vector<8x1xf32>
      %c0_72 = arith.constant 0 : index
      %c0_73 = arith.constant 0 : index
      %69 = vector.load %arg8[%c0_72, %c0_73] : memref<8x1xf32, #tpu.memory_space<vmem>>, vector<8x1xf32>
      tpu.vector_store %arg8[%c0_72, %c0_73], %68 {strides = array<i32>} : memref<8x1xf32, #tpu.memory_space<vmem>>, vector<8x1xf32>,
    } else {
    }
    %c0_i32_65 = arith.constant 0 : i32
    %60 = arith.cmpi eq, %arg0, %c0_i32_65 : i32
    %61 = arith.extui %60 : i1 to i32
    %c0_i32_66 = arith.constant 0 : i32
    %62 = arith.cmpi ne, %61, %c0_i32_66 : i32
    scf.if %62 {
      %c64_i32 = arith.constant 64 : i32
      %66 = arith.muli %arg1, %c64_i32 : i32
      %67 = arith.sitofp %66 : i32 to f32
      %cst_68 = arith.constant 6.400000e+01 : f32
      %68 = arith.addf %67, %cst_68 : f32
      %cst_69 = arith.constant dense<0.000000e+00> : vector<8xf32>
      %69 = vector.multi_reduction <add>, %54, %cst_69 [1] : vector<8x64xf32> to vector<8xf32>
      %70 = vector.shape_cast %69 : vector<8xf32> to vector<8x1xf32>
      %cst_70 = arith.constant 6.400000e+01 : f32
      %71 = vector.broadcast %cst_70 : f32 to vector<8x1xf32>
      %72 = arith.divf %70, %71 : vector<8x1xf32>
      %73 = vector.broadcast %72 : vector<8x1xf32> to vector<8x64xf32>
      %74 = arith.subf %54, %73 : vector<8x64xf32>
      %75 = arith.mulf %74, %74 : vector<8x64xf32>
      %cst_71 = arith.constant dense<0.000000e+00> : vector<8xf32>
      %76 = vector.multi_reduction <add>, %75, %cst_71 [1] : vector<8x64xf32> to vector<8xf32>
      %77 = vector.shape_cast %76 : vector<8xf32> to vector<8x1xf32>
      %c0_72 = arith.constant 0 : index
      %c0_73 = arith.constant 0 : index
      %78 = vector.load %arg7[%c0_72, %c0_73] : memref<8x1xf32, #tpu.memory_space<vmem>>, vector<8x1xf32>
      %79 = arith.subf %72, %78 : vector<8x1xf32>
      %c0_74 = arith.constant 0 : index
      %c0_75 = arith.constant 0 : index
      %80 = vector.load %arg7[%c0_74, %c0_75] : memref<8x1xf32, #tpu.memory_space<vmem>>, vector<8x1xf32>
      %cst_76 = arith.constant 6.400000e+01 : f32
      %81 = arith.divf %cst_76, %68 : f32
      %82 = vector.broadcast %81 : f32 to vector<8x1xf32>
      %83 = arith.mulf %79, %82 : vector<8x1xf32>
      %84 = arith.addf %80, %83 : vector<8x1xf32>
      %c0_77 = arith.constant 0 : index
      %c0_78 = arith.constant 0 : index
      %85 = vector.load %arg7[%c0_77, %c0_78] : memref<8x1xf32, #tpu.memory_space<vmem>>, vector<8x1xf32>
      tpu.vector_store %arg7[%c0_77, %c0_78], %84 {strides = array<i32>} : memref<8x1xf32, #tpu.memory_space<vmem>>, vector<8x1xf32>,
      %c0_79 = arith.constant 0 : index
      %c0_80 = arith.constant 0 : index
      %86 = vector.load %arg8[%c0_79, %c0_80] : memref<8x1xf32, #tpu.memory_space<vmem>>, vector<8x1xf32>
      %87 = arith.addf %86, %77 : vector<8x1xf32>
      %88 = arith.mulf %79, %79 : vector<8x1xf32>
      %cst_81 = arith.constant 6.400000e+01 : f32
      %89 = arith.mulf %67, %cst_81 : f32
      %90 = arith.divf %89, %68 : f32
      %91 = vector.broadcast %90 : f32 to vector<8x1xf32>
      %92 = arith.mulf %88, %91 : vector<8x1xf32>
      %93 = arith.addf %87, %92 : vector<8x1xf32>
      %c0_82 = arith.constant 0 : index
      %c0_83 = arith.constant 0 : index
      %94 = vector.load %arg8[%c0_82, %c0_83] : memref<8x1xf32, #tpu.memory_space<vmem>>, vector<8x1xf32>
      tpu.vector_store %arg8[%c0_82, %c0_83], %93 {strides = array<i32>} : memref<8x1xf32, #tpu.memory_space<vmem>>, vector<8x1xf32>,
    } else {
    }
    %c1_i32 = arith.constant 1 : i32
    %63 = arith.cmpi eq, %arg0, %c1_i32 : i32
    %64 = arith.extui %63 : i1 to i32
    %c0_i32_67 = arith.constant 0 : i32
    %65 = arith.cmpi ne, %64, %c0_i32_67 : i32
    scf.if %65 {
      %c0_68 = arith.constant 0 : index
      %c0_69 = arith.constant 0 : index
      %66 = vector.load %arg7[%c0_68, %c0_69] : memref<8x1xf32, #tpu.memory_space<vmem>>, vector<8x1xf32>
      %c0_70 = arith.constant 0 : index
      %c0_71 = arith.constant 0 : index
      %67 = vector.load %arg8[%c0_70, %c0_71] : memref<8x1xf32, #tpu.memory_space<vmem>>, vector<8x1xf32>
      %cst_72 = arith.constant 7.812500e-03 : f32
      %68 = vector.broadcast %cst_72 : f32 to vector<8x1xf32>
      %69 = arith.mulf %67, %68 : vector<8x1xf32>
      %cst_73 = arith.constant 0.000000e+00 : f32
      %70 = vector.broadcast %cst_73 : f32 to vector<8x1xf32>
      %71 = arith.maximumf %69, %70 : vector<8x1xf32>
      %c0_74 = arith.constant 0 : index
      %c0_75 = arith.constant 0 : index
      %72 = vector.load %arg4[%c0_74, %c0_75] : memref<8x1xf32, #tpu.memory_space<vmem>>, vector<8x1xf32>
      %cst_76 = arith.constant 9.99999974E-6 : f32
      %73 = vector.broadcast %cst_76 : f32 to vector<8x1xf32>
      %74 = arith.addf %71, %73 : vector<8x1xf32>
      %75 = math.rsqrt %74 : vector<8x1xf32>
      %76 = arith.mulf %72, %75 : vector<8x1xf32>
      %c0_77 = arith.constant 0 : index
      %c0_78 = arith.constant 0 : index
      %77 = vector.load %arg5[%c0_77, %c0_78] : memref<8x1xf32, #tpu.memory_space<vmem>>, vector<8x1xf32>
      %78 = arith.mulf %66, %76 : vector<8x1xf32>
      %79 = arith.subf %77, %78 : vector<8x1xf32>
      %80 = vector.broadcast %76 : vector<8x1xf32> to vector<8x64xf32>
      %81 = arith.mulf %54, %80 : vector<8x64xf32>
      %82 = vector.broadcast %79 : vector<8x1xf32> to vector<8x64xf32>
      %83 = arith.addf %81, %82 : vector<8x64xf32>
      %cst_79 = arith.constant 0.000000e+00 : f32
      %84 = vector.broadcast %cst_79 : f32 to vector<8x64xf32>
      %85 = arith.maximumf %83, %84 : vector<8x64xf32>
      %c0_80 = arith.constant 0 : index
      %c0_81 = arith.constant 0 : index
      %c0_82 = arith.constant 0 : index
      %86 = vector.load %arg6[%c0_80, %c0_81, %c0_82] : memref<1x8x64xf32, #tpu.memory_space<vmem>>, vector<1x8x64xf32>
      %87 = vector.shape_cast %86 : vector<1x8x64xf32> to vector<8x64xf32>
      %88 = vector.shape_cast %85 : vector<8x64xf32> to vector<1x8x64xf32>
      tpu.vector_store %arg6[%c0_80, %c0_81, %c0_82], %88 {strides = array<i32>} : memref<1x8x64xf32, #tpu.memory_space<vmem>>, vector<1x8x64xf32>,
    } else {
    }
    return
  }
  func.func @transform_0(%arg0: i32, %arg1: i32) -> (i32, i32, i32, i32) {
    %c0_i32 = arith.constant 0 : i32
    %c0_i32_0 = arith.constant 0 : i32
    %c0_i32_1 = arith.constant 0 : i32
    %c0_i32_2 = arith.constant 0 : i32
    return %c0_i32, %arg1, %c0_i32_0, %c0_i32_1 : i32, i32, i32, i32
  }
  func.func @transform_1(%arg0: i32, %arg1: i32) -> (i32, i32, i32) {
    %c0_i32 = arith.constant 0 : i32
    %c0_i32_0 = arith.constant 0 : i32
    %c0_i32_1 = arith.constant 0 : i32
    %c0_i32_2 = arith.constant 0 : i32
    return %c0_i32, %c0_i32_0, %c0_i32_1 : i32, i32, i32
  }
  func.func @transform_2(%arg0: i32, %arg1: i32) -> (i32, i32) {
    %c0_i32 = arith.constant 0 : i32
    %c0_i32_0 = arith.constant 0 : i32
    %c0_i32_1 = arith.constant 0 : i32
    return %c0_i32, %c0_i32_0 : i32, i32
  }
  func.func @transform_3(%arg0: i32, %arg1: i32) -> (i32, i32) {
    %c0_i32 = arith.constant 0 : i32
    %c0_i32_0 = arith.constant 0 : i32
    %c0_i32_1 = arith.constant 0 : i32
    return %c0_i32, %c0_i32_0 : i32, i32
  }
  func.func @transform_4(%arg0: i32, %arg1: i32) -> (i32, i32, i32) {
    %0 = arith.muli %arg0, %arg1 : i32
    %c0_i32 = arith.constant 0 : i32
    %c0_i32_0 = arith.constant 0 : i32
    %c0_i32_1 = arith.constant 0 : i32
    return %0, %c0_i32, %c0_i32_0 : i32, i32, i32
  }
}

</mosaic_0001>

<llo_original>
// kernel: tpu_custom_call.1
$region0: #{tpu_custom_call.1}
  #allocation0 [shape = 'u32[]', space=smem, size = 0x4, offset = 0x4, fixed_abs, tag = 'smem constant byte address 0x4 - core index']
  #allocation1 [shape = 'u32[72,128]{1,0:T(1,128)}', space=vmem, size = 0x9000, scoped, tag = 'internal scratch']
  #allocation2 [shape = 'f32[8,1]{1,0:T(8,128)}', space=vmem, size = 0x1000, scoped, tag = 'scratch operand']
  #allocation3 [shape = 'f32[8,1]{1,0:T(8,128)}', space=vmem, size = 0x1000, scoped, tag = 'scratch operand']
  %s0 = inlined_call_operand.vmem [shape: f32[6,2,4,72], index: 0, kind: input, shape index: {}]
  %s1 = inlined_call_operand.vmem [shape: f32[9,8,4], index: 1, kind: input, shape index: {}]
  %s2 = inlined_call_operand.vmem [shape: f32[8,1], index: 2, kind: input, shape index: {}]
  %s3 = inlined_call_operand.vmem [shape: f32[8,1], index: 3, kind: input, shape index: {}]
  %s4 = inlined_call_operand.hbm [shape: f32[2,8,64], index: 4, kind: output, shape index: {}]
  %s5 = sld [smem:[#allocation0]]
  $region102: #{tpu_custom_call.1} parent=0
    _
  %s7 = ssub.s32 1, %s5
  %s8 = scalar_select 0, %s7, %s5
  $region1: #{tpu_custom_call.1} parent=0
    #allocation4 [shape = 'u8[24576]{0}', space=vmem, size = 0x6000, scoped, tag = 'input window, operand 0']
    #allocation5 [shape = 'u8[8192]{0}', space=vmem, size = 0x2000, scoped, tag = 'output window, operand 0']
    #allocation6 [shape = 's32[2]{0}', space=sflag, size = 0x8, scoped, tag = 'scoped memory for tpu_custom_call.1']
    %9 = vsyncpa [#allocation6], 0
    %s10 = scalar_lea.sflag [#allocation6], 1
    %11 = vsyncpa %s10, 0
    loop: start=0, step=1, limit=6
    $region2: #{tpu_custom_call.1} parent=1 // loop_pre_header
      _
    $region3: #{tpu_custom_call.1} parent=1 // loop_header
      %s13 = sphi 0, %s17
      %p14 = scmp.ge.s32.totalorder %s13, 6
      %s20 = sphi 0, %s32
      %s21 = sphi 0, %s28
      %s22 = sphi 0, %s20
      %s23 = sphi 0, %s21
      %s24 = sphi 0, %s22
      %s25 = sphi 0, %s23
      %s35 = sphi 0, %s37
      %s38 = sphi 0, %s35
      %s39 = sphi 0, %s38
      %s55 = sphi 0, %s39
      %s59 = sphi 0, %s59
      %s61 = sphi 0, %s59
      %s62 = sphi 0, %s61
      %s76 = sphi 0, %s62
      %s80 = sphi 0, %s80
      %s82 = sphi 0, %s80
      %s83 = sphi 0, %s82
      %s97 = sphi 0, %s83
      %s101 = sphi 0, %s101
      %s103 = sphi 0, %s101
      %s104 = sphi 0, %s103
      %s118 = sphi 0, %s104
      %s126 = sphi 0, %s128
      %s129 = sphi 0, %s126
      %s130 = sphi 0, %s129
      %s146 = sphi 0, %s130
    $region4: #{tpu_custom_call.1} parent=1 // loop_header_branch
      %16 = sbr.rel (%p14) target = $region8
    $region5: #{tpu_custom_call.1} parent=1 // loop_body
      %s18 = ssub.s32 %s13, 1
      %s19 = ssub.s32 %s13, 2
      %s26 = sadd.s32 1, %s21
      %p27 = scmp.ge.s32.totalorder %s26, 2
      %s28 = scalar_select %p27, 0, %s26
      %s29 = sadd.s32 1, %s20
      %s30 = scalar_select %p27, %s29, %s20
      %p31 = scmp.ge.s32.totalorder %s30, 2
      %s32 = scalar_select %p31, 0, %s30
      %s33 = ssub.s32 %s21, %s28
      %p34 = scmp.eq.s32.totalorder %s33, 0
      %s36 = sadd.s32 %s35, 1
      %s37 = scalar_select %p34, %s35, %s36
      %p40 = pneg %p34
      %p41 = scmp.eq.s32.totalorder %s13, 3
      %p42 = por %p40, %p41
      %p43 = scmp.ne.s32.totalorder %s35, %s38
      %p44 = scmp.eq.s32.totalorder %s13, 0
      %p45 = por %p43, %p44
      %p46 = scmp.ne.s32.totalorder %s35, %s38
      %p47 = scmp.eq.s32.totalorder %s18, 3
      %p48 = por %p46, %p47
      %p49 = scmp.ne.s32.totalorder %s38, %s39
      %p50 = scmp.eq.s32.totalorder %s18, 0
      %p51 = por %p49, %p50
      %p52 = scmp.ne.s32.totalorder %s38, %s39
      %p53 = scmp.eq.s32.totalorder %s19, 3
      %p54 = por %p52, %p53
      %p56 = scmp.ne.s32.totalorder %s39, %s55
      %p57 = scmp.eq.s32.totalorder %s19, 0
      %p58 = por %p56, %p57
      %s60 = sadd.s32 %s59, 1
      %p63 = scmp.eq.s32.totalorder %s13, 3
      %p64 = scmp.ne.s32.totalorder %s59, %s61
      %p65 = scmp.eq.s32.totalorder %s13, 0
      %p66 = por %p64, %p65
      %p67 = scmp.ne.s32.totalorder %s59, %s61
      %p68 = scmp.eq.s32.totalorder %s18, 3
      %p69 = por %p67, %p68
      %p70 = scmp.ne.s32.totalorder %s61, %s62
      %p71 = scmp.eq.s32.totalorder %s18, 0
      %p72 = por %p70, %p71
      %p73 = scmp.ne.s32.totalorder %s61, %s62
      %p74 = scmp.eq.s32.totalorder %s19, 3
      %p75 = por %p73, %p74
      %p77 = scmp.ne.s32.totalorder %s62, %s76
      %p78 = scmp.eq.s32.totalorder %s19, 0
      %p79 = por %p77, %p78
      %s81 = sadd.s32 %s80, 1
      %p84 = scmp.eq.s32.totalorder %s13, 3
      %p85 = scmp.ne.s32.totalorder %s80, %s82
      %p86 = scmp.eq.s32.totalorder %s13, 0
      %p87 = por %p85, %p86
      %p88 = scmp.ne.s32.totalorder %s80, %s82
      %p89 = scmp.eq.s32.totalorder %s18, 3
      %p90 = por %p88, %p89
      %p91 = scmp.ne.s32.totalorder %s82, %s83
      %p92 = scmp.eq.s32.totalorder %s18, 0
      %p93 = por %p91, %p92
      %p94 = scmp.ne.s32.totalorder %s82, %s83
      %p95 = scmp.eq.s32.totalorder %s19, 3
      %p96 = por %p94, %p95
      %p98 = scmp.ne.s32.totalorder %s83, %s97
      %p99 = scmp.eq.s32.totalorder %s19, 0
      %p100 = por %p98, %p99
      %s102 = sadd.s32 %s101, 1
      %p105 = scmp.eq.s32.totalorder %s13, 3
      %p106 = scmp.ne.s32.totalorder %s101, %s103
      %p107 = scmp.eq.s32.totalorder %s13, 0
      %p108 = por %p106, %p107
      %p109 = scmp.ne.s32.totalorder %s101, %s103
      %p110 = scmp.eq.s32.totalorder %s18, 3
      %p111 = por %p109, %p110
      %p112 = scmp.ne.s32.totalorder %s103, %s104
      %p113 = scmp.eq.s32.totalorder %s18, 0
      %p114 = por %p112, %p113
      %p115 = scmp.ne.s32.totalorder %s103, %s104
      %p116 = scmp.eq.s32.totalorder %s19, 3
      %p117 = por %p115, %p116
      %p119 = scmp.ne.s32.totalorder %s104, %s118
      %p120 = scmp.eq.s32.totalorder %s19, 0
      %p121 = por %p119, %p120
      %s122 = smul.u32 %s20, %s21
      %s123 = smul.u32 %s32, %s28
      %s124 = ssub.s32 %s122, %s123
      %p125 = scmp.eq.s32.totalorder %s124, 0
      %s127 = sadd.s32 %s126, 1
      %s128 = scalar_select %p125, %s126, %s127
      %p131 = pneg %p125
      %p132 = scmp.eq.s32.totalorder %s13, 3
      %p133 = por %p131, %p132
      %p134 = scmp.ne.s32.totalorder %s126, %s129
      %p135 = scmp.eq.s32.totalorder %s13, 0
      %p136 = por %p134, %p135
      %p137 = scmp.ne.s32.totalorder %s126, %s129
      %p138 = scmp.eq.s32.totalorder %s18, 3
      %p139 = por %p137, %p138
      %p140 = scmp.ne.s32.totalorder %s129, %s130
      %p141 = scmp.eq.s32.totalorder %s18, 0
      %p142 = por %p140, %p141
      %p143 = scmp.ne.s32.totalorder %s129, %s130
      %p144 = scmp.eq.s32.totalorder %s19, 3
      %p145 = por %p143, %p144
      %p147 = scmp.ne.s32.totalorder %s130, %s146
      %p148 = scmp.eq.s32.totalorder %s19, 0
      %p149 = por %p147, %p148
      %p150 = scmp.le.s32.totalorder 1, %s13
      %p151 = scmp.lt.s32.totalorder %s13, 5
      %p152 = pnand %p150, %p151
      %p153 = pneg %p152
      // Predicated region
      $region9: #{tpu_custom_call.1} parent=5 // pred_check
        _
      $region10: #{tpu_custom_call.1} parent=5 // pred_check_branch
        %155 = sbr.rel (%p152) target = $region12
      $region11: #{tpu_custom_call.1} parent=5 // pred_region
        %s156 = ssub.s32 %s13, 1
        // Predicated region
        $region13: #{tpu_custom_call.1} parent=11 // pred_check
          %p157 = pneg %p72
        $region14: #{tpu_custom_call.1} parent=11 // pred_check_branch
          %159 = sbr.rel (%p157) target = $region16
        $region15: #{tpu_custom_call.1} parent=11 // pred_region
          _
        $region16: #{tpu_custom_call.1} parent=11 // pred_fallthru
          _
        // Predicated region
        $region17: #{tpu_custom_call.1} parent=11 // pred_check
          %p160 = pneg %p93
        $region18: #{tpu_custom_call.1} parent=11 // pred_check_branch
          %162 = sbr.rel (%p160) target = $region20
        $region19: #{tpu_custom_call.1} parent=11 // pred_region
          _
        $region20: #{tpu_custom_call.1} parent=11 // pred_fallthru
          _
        // Predicated region
        $region21: #{tpu_custom_call.1} parent=11 // pred_check
          %p163 = pneg %p114
        $region22: #{tpu_custom_call.1} parent=11 // pred_check_branch
          %165 = sbr.rel (%p163) target = $region24
        $region23: #{tpu_custom_call.1} parent=11 // pred_region
          _
        $region24: #{tpu_custom_call.1} parent=11 // pred_fallthru
          _
      $region12: #{tpu_custom_call.1} parent=5 // pred_fallthru
        _
      %p166 = scmp.lt.s32.totalorder %s13, 4
      // Predicated region
      $region25: #{tpu_custom_call.1} parent=5 // pred_check
        %p167 = pneg %p166
      $region26: #{tpu_custom_call.1} parent=5 // pred_check_branch
        %169 = sbr.rel (%p167) target = $region28
      $region27: #{tpu_custom_call.1} parent=5 // pred_region
        // Predicated region
        $region29: #{tpu_custom_call.1} parent=27 // pred_check
          %p170 = pneg %p45
        $region30: #{tpu_custom_call.1} parent=27 // pred_check_branch
          %172 = sbr.rel (%p170) target = $region32
        $region31: #{tpu_custom_call.1} parent=27 // pred_region
          %s173 = sand.u32 %s35, 1
          %s174 = sand.u32 %s35, 1
          %s175 = smul.addr %s174, 24
          %s176 = scalar_lea.vmem [#allocation4], %s175
          %s177 = smul.addr %s21, 4
          %s178 = scalar_lea.vmem %s0, %s177
          // Predicated region
          $region33: #{tpu_custom_call.1} parent=31 // pred_check
            _
          $region34: #{tpu_custom_call.1} parent=31 // pred_check_branch
            %180 = sbr.rel (0) target = $region36
          $region35: #{tpu_custom_call.1} parent=31 // pred_region
            // Predicated region
            $region37: #{tpu_custom_call.1} parent=35 // pred_check
              _
            $region38: #{tpu_custom_call.1} parent=35 // pred_check_branch
              %182 = sbr.rel target = $region40
            $region39: #{tpu_custom_call.1} parent=35 // pred_region
              // Predicated region
              $region52: #{tpu_custom_call.1} parent=39 // pred_check
                _
              $region53: #{tpu_custom_call.1} parent=39 // pred_check_branch
                %208 = sbr.rel (0) target = $region55
              $region54: #{tpu_custom_call.1} parent=39 // pred_region
                loop: start=0, step=1, limit=1
                $region56: #{tpu_custom_call.1} parent=54 // loop_pre_header
                  _
                $region57: #{tpu_custom_call.1} parent=54 // loop_header
                  %s210 = sphi 0, %s214
                  %p211 = scmp.ge.s32.totalorder %s210, 1
                  %s215 = sphi %s178, %s178
                  %s216 = sphi %s176, %s176
                $region58: #{tpu_custom_call.1} parent=54 // loop_header_branch
                  %213 = sbr.rel (%p211) target = $region62
                $region59: #{tpu_custom_call.1} parent=54 // loop_body
                  _
                $region60: #{tpu_custom_call.1} parent=54 // loop_footer
                  %s214 = sadd.s32 1, %s210
                $region61: #{tpu_custom_call.1} parent=54 // loop_footer_branch
                  %209 = sbr.rel target = $region57
                $region62: #{tpu_custom_call.1} parent=54 // loop_exit
                  _
                %s218 = ssub.s32 16, 1
                loop: start=0, step=1, limit=1
                $region63: #{tpu_custom_call.1} parent=54 // loop_pre_header
                  _
                $region64: #{tpu_custom_call.1} parent=54 // loop_header
                  %s220 = sphi 0, %s224
                  %p221 = scmp.ge.s32.totalorder %s220, 1
                  %s225 = sphi %s178, %s178
                  %s226 = sphi %s176, %s176
                $region65: #{tpu_custom_call.1} parent=54 // loop_header_branch
                  %223 = sbr.rel (%p221) target = $region69
                $region66: #{tpu_custom_call.1} parent=54 // loop_body
                  %v227 = vld [vmem:[%s225] sm:%s218]
                  %228 = vst [vmem:[%s226] sm:%s218] %v227
                  %v229 = vld [vmem:[%s225 + $0x8] sm:%s218]
                  %230 = vst [vmem:[%s226 + $0x4] sm:%s218] %v229
                  %v231 = vld [vmem:[%s225 + $0x10] sm:%s218]
                  %232 = vst [vmem:[%s226 + $0x8] sm:%s218] %v231
                  %v233 = vld [vmem:[%s225 + $0x18] sm:%s218]
                  %234 = vst [vmem:[%s226 + $0xc] sm:%s218] %v233
                  %v235 = vld [vmem:[%s225 + $0x20] sm:%s218]
                  %236 = vst [vmem:[%s226 + $0x10] sm:%s218] %v235
                  %v237 = vld [vmem:[%s225 + $0x28] sm:%s218]
                  %238 = vst [vmem:[%s226 + $0x14] sm:%s218] %v237
                $region67: #{tpu_custom_call.1} parent=54 // loop_footer
                  %s224 = sadd.s32 1, %s220
                $region68: #{tpu_custom_call.1} parent=54 // loop_footer_branch
                  %219 = sbr.rel target = $region64
                $region69: #{tpu_custom_call.1} parent=54 // loop_exit
                  _
              $region55: #{tpu_custom_call.1} parent=39 // pred_fallthru
                _
            $region40: #{tpu_custom_call.1} parent=35 // pred_fallthru
              _
            // Predicated region
            $region41: #{tpu_custom_call.1} parent=35 // pred_check
              _
            $region42: #{tpu_custom_call.1} parent=35 // pred_check_branch
              %184 = sbr.rel (0) target = $region44
            $region43: #{tpu_custom_call.1} parent=35 // pred_region
              %s186 = ssub.s32 16, 1
              loop: start=0, step=1, limit=1
              $region45: #{tpu_custom_call.1} parent=43 // loop_pre_header
                _
              $region46: #{tpu_custom_call.1} parent=43 // loop_header
                %s188 = sphi 0, %s192
                %p189 = scmp.ge.s32.totalorder %s188, 1
                %s193 = sphi %s178, %s178
                %s194 = sphi %s176, %s176
              $region47: #{tpu_custom_call.1} parent=43 // loop_header_branch
                %191 = sbr.rel (%p189) target = $region51
              $region48: #{tpu_custom_call.1} parent=43 // loop_body
                %v195 = vld [vmem:[%s193] sm:%s186]
                %196 = vst [vmem:[%s194] sm:%s186] %v195
                %v197 = vld [vmem:[%s193 + $0x8] sm:%s186]
                %198 = vst [vmem:[%s194 + $0x4] sm:%s186] %v197
                %v199 = vld [vmem:[%s193 + $0x10] sm:%s186]
                %200 = vst [vmem:[%s194 + $0x8] sm:%s186] %v199
                %v201 = vld [vmem:[%s193 + $0x18] sm:%s186]
                %202 = vst [vmem:[%s194 + $0xc] sm:%s186] %v201
                %v203 = vld [vmem:[%s193 + $0x20] sm:%s186]
                %204 = vst [vmem:[%s194 + $0x10] sm:%s186] %v203
                %v205 = vld [vmem:[%s193 + $0x28] sm:%s186]
                %206 = vst [vmem:[%s194 + $0x14] sm:%s186] %v205
              $region49: #{tpu_custom_call.1} parent=43 // loop_footer
                %s192 = sadd.s32 1, %s188
              $region50: #{tpu_custom_call.1} parent=43 // loop_footer_branch
                %187 = sbr.rel target = $region46
              $region51: #{tpu_custom_call.1} parent=43 // loop_exit
                _
            $region44: #{tpu_custom_call.1} parent=35 // pred_fallthru
              _
          $region36: #{tpu_custom_call.1} parent=31 // pred_fallthru
            _
          %239 = vnop
        $region32: #{tpu_custom_call.1} parent=27 // pred_fallthru
          _
      $region28: #{tpu_custom_call.1} parent=5 // pred_fallthru
        _
      %p240 = scmp.le.s32.totalorder 1, %s13
      %p241 = scmp.lt.s32.totalorder %s13, 5
      %p242 = pnand %p240, %p241
      %p243 = pneg %p242
      // Predicated region
      $region70: #{tpu_custom_call.1} parent=5 // pred_check
        _
      $region71: #{tpu_custom_call.1} parent=5 // pred_check_branch
        %245 = sbr.rel (%p242) target = $region73
      $region72: #{tpu_custom_call.1} parent=5 // pred_region
        %s246 = ssub.s32 %s13, 1
        %s247 = sand.u32 %s38, 1
        %s248 = sand.u32 %s38, 1
        %s249 = smul.addr %s248, 24
        %s250 = scalar_lea.vmem [#allocation4], %s249
        // Predicated region
        $region74: #{tpu_custom_call.1} parent=72 // pred_check
          %p251 = pneg %p51
        $region75: #{tpu_custom_call.1} parent=72 // pred_check_branch
          %253 = sbr.rel (%p251) target = $region77
        $region76: #{tpu_custom_call.1} parent=72 // pred_region
          _
        $region77: #{tpu_custom_call.1} parent=72 // pred_fallthru
          _
        %s254 = sand.u32 %s38, 1
        %s255 = sand.u32 %s38, 1
        %s256 = smul.addr %s255, 24
        %s257 = scalar_lea.vmem [#allocation4], %s256
        %p258 = pneg %p51
        %p259 = pneg %p48
        %p260 = pneg %p72
        %p261 = pneg %p69
        %p262 = pneg %p93
        %p263 = pneg %p90
        %p264 = pneg %p114
        %p265 = pneg %p111
        %p266 = pneg %p142
        %p267 = pneg %p139
        %s268 = sand.u32 %s129, 1
        %s269 = scalar_lea.sflag [#allocation6], %s268
        %s270 = sand.u32 %s129, 1
        %s271 = smul.addr %s270, 8
        %s272 = scalar_lea.vmem [#allocation5], %s271
        %s273 = smul.u32 %s22, %s23
        %v274 = vld [vmem:[%s250] sm:$0xf]
        %v275 = vld [vmem:[%s1] sm:$0xff]
        %s276 = scalar_lea.vmem %s250, 8 [#allocation4]
        %v277 = vld [vmem:[%s276] sm:$0xf]
        %s278 = scalar_lea.vmem %s1, 8
        %v279 = vld [vmem:[%s278] sm:$0xff]
        %vm280 = vcmask 31744
        %v282 = vsel %vm280, %v279, 0
        %vm284 = vcmask 1043456
        %v286 = vsel %vm284, %v277, 0
        %288 = vmatpush.msra.mxu0 0.0
        %289 = vmatpush.msra.mxu0 0.0
        %290 = vmatpush.msra.mxu0 0.0
        %291 = vmatpush.msra.mxu0 0.0
        %292 = vmatpush.msra.mxu0 0.0
        %293 = vmatpush.msra.mxu0 0.0
        %294 = vmatpush.msra.mxu0 0.0
        %295 = vmatpush.msra.mxu0 0.0
        %296 = vmatpush.msra.mxu0 0.0
        %297 = vmatpush.msra.mxu0 0.0
        %298 = vmatpush.msra.mxu0 0.0
        %299 = vmatpush.msra.mxu0 0.0
        %300 = vmatpush.msra.mxu0 0.0
        %301 = vmatpush.msra.mxu0 0.0
        %302 = vmatpush.msra.mxu0 0.0
        %303 = vmatpush.msra.mxu0 %v286
        %304 = vmatmul.f32.gmra.mxu0 %v282
        %v305 = vpop.f32.mrf.mxu0
        %v306 = vadd.f32 0.0, %v305
        %307 = vdwg.mxu0
        %v309 = vsel %vm280, %v275, 0
        %v312 = vsel %vm284, %v274, 0
        %314 = vmatpush.msra.mxu0 0.0
        %315 = vmatpush.msra.mxu0 0.0
        %316 = vmatpush.msra.mxu0 0.0
        %317 = vmatpush.msra.mxu0 0.0
        %318 = vmatpush.msra.mxu0 0.0
        %319 = vmatpush.msra.mxu0 0.0
        %320 = vmatpush.msra.mxu0 0.0
        %321 = vmatpush.msra.mxu0 0.0
        %322 = vmatpush.msra.mxu0 0.0
        %323 = vmatpush.msra.mxu0 0.0
        %324 = vmatpush.msra.mxu0 0.0
        %325 = vmatpush.msra.mxu0 0.0
        %326 = vmatpush.msra.mxu0 0.0
        %327 = vmatpush.msra.mxu0 0.0
        %328 = vmatpush.msra.mxu0 0.0
        %329 = vmatpush.msra.mxu0 %v312
        %330 = vmatmul.f32.gmra.mxu0 %v309
        %v331 = vpop.f32.mrf.mxu0
        %v332 = vadd.f32 %v306, %v331
        %333 = vdwg.mxu0
        %s334 = scalar_lea.vmem %s250, 16 [#allocation4]
        %v335 = vld [vmem:[%s334] sm:$0xf]
        %s336 = scalar_lea.vmem %s1, 16
        %v337 = vld [vmem:[%s336] sm:$0xff]
        %v339 = vsel %vm280, %v337, 0
        %v342 = vsel %vm284, %v335, 0
        %344 = vmatpush.msra.mxu0 0.0
        %345 = vmatpush.msra.mxu0 0.0
        %346 = vmatpush.msra.mxu0 0.0
        %347 = vmatpush.msra.mxu0 0.0
        %348 = vmatpush.msra.mxu0 0.0
        %349 = vmatpush.msra.mxu0 0.0
        %350 = vmatpush.msra.mxu0 0.0
        %351 = vmatpush.msra.mxu0 0.0
        %352 = vmatpush.msra.mxu0 0.0
        %353 = vmatpush.msra.mxu0 0.0
        %354 = vmatpush.msra.mxu0 0.0
        %355 = vmatpush.msra.mxu0 0.0
        %356 = vmatpush.msra.mxu0 0.0
        %357 = vmatpush.msra.mxu0 0.0
        %358 = vmatpush.msra.mxu0 0.0
        %359 = vmatpush.msra.mxu0 %v342
        %360 = vmatmul.f32.gmra.mxu0 %v339
        %v361 = vpop.f32.mrf.mxu0
        %v362 = vadd.f32 0.0, %v361
        %363 = vdwg.mxu0
        %v364 = vadd.f32 %v332, %v362
        %s365 = scalar_lea.vmem %s250, 4 [#allocation4]
        %v366 = vld [vmem:[%s365] sm:$0xf]
        %s367 = scalar_lea.vmem %s1, 24
        %v368 = vld [vmem:[%s367] sm:$0xff]
        %v370 = vsel %vm280, %v368, 0
        %v373 = vsel %vm284, %v366, 0
        %375 = vmatpush.msra.mxu0 0.0
        %376 = vmatpush.msra.mxu0 0.0
        %377 = vmatpush.msra.mxu0 0.0
        %378 = vmatpush.msra.mxu0 0.0
        %379 = vmatpush.msra.mxu0 0.0
        %380 = vmatpush.msra.mxu0 0.0
        %381 = vmatpush.msra.mxu0 0.0
        %382 = vmatpush.msra.mxu0 0.0
        %383 = vmatpush.msra.mxu0 0.0
        %384 = vmatpush.msra.mxu0 0.0
        %385 = vmatpush.msra.mxu0 0.0
        %386 = vmatpush.msra.mxu0 0.0
        %387 = vmatpush.msra.mxu0 0.0
        %388 = vmatpush.msra.mxu0 0.0
        %389 = vmatpush.msra.mxu0 0.0
        %390 = vmatpush.msra.mxu0 %v373
        %391 = vmatmul.f32.gmra.mxu0 %v370
        %v392 = vpop.f32.mrf.mxu0
        %v393 = vadd.f32 0.0, %v392
        %394 = vdwg.mxu0
        %v395 = vadd.f32 %v364, %v393
        %s396 = scalar_lea.vmem %s250, 12 [#allocation4]
        %v397 = vld [vmem:[%s396] sm:$0xf]
        %s398 = scalar_lea.vmem %s1, 32
        %v399 = vld [vmem:[%s398] sm:$0xff]
        %v401 = vsel %vm280, %v399, 0
        %v404 = vsel %vm284, %v397, 0
        %406 = vmatpush.msra.mxu0 0.0
        %407 = vmatpush.msra.mxu0 0.0
        %408 = vmatpush.msra.mxu0 0.0
        %409 = vmatpush.msra.mxu0 0.0
        %410 = vmatpush.msra.mxu0 0.0
        %411 = vmatpush.msra.mxu0 0.0
        %412 = vmatpush.msra.mxu0 0.0
        %413 = vmatpush.msra.mxu0 0.0
        %414 = vmatpush.msra.mxu0 0.0
        %415 = vmatpush.msra.mxu0 0.0
        %416 = vmatpush.msra.mxu0 0.0
        %417 = vmatpush.msra.mxu0 0.0
        %418 = vmatpush.msra.mxu0 0.0
        %419 = vmatpush.msra.mxu0 0.0
        %420 = vmatpush.msra.mxu0 0.0
        %421 = vmatpush.msra.mxu0 %v404
        %422 = vmatmul.f32.gmra.mxu0 %v401
        %v423 = vpop.f32.mrf.mxu0
        %v424 = vadd.f32 0.0, %v423
        %425 = vdwg.mxu0
        %v426 = vadd.f32 %v395, %v424
        %s427 = scalar_lea.vmem %s250, 20 [#allocation4]
        %v428 = vld [vmem:[%s427] sm:$0xf]
        %s429 = scalar_lea.vmem %s1, 40
        %v430 = vld [vmem:[%s429] sm:$0xff]
        %v432 = vsel %vm280, %v430, 0
        %v435 = vsel %vm284, %v428, 0
        %437 = vmatpush.msra.mxu0 0.0
        %438 = vmatpush.msra.mxu0 0.0
        %439 = vmatpush.msra.mxu0 0.0
        %440 = vmatpush.msra.mxu0 0.0
        %441 = vmatpush.msra.mxu0 0.0
        %442 = vmatpush.msra.mxu0 0.0
        %443 = vmatpush.msra.mxu0 0.0
        %444 = vmatpush.msra.mxu0 0.0
        %445 = vmatpush.msra.mxu0 0.0
        %446 = vmatpush.msra.mxu0 0.0
        %447 = vmatpush.msra.mxu0 0.0
        %448 = vmatpush.msra.mxu0 0.0
        %449 = vmatpush.msra.mxu0 0.0
        %450 = vmatpush.msra.mxu0 0.0
        %451 = vmatpush.msra.mxu0 0.0
        %452 = vmatpush.msra.mxu0 %v435
        %453 = vmatmul.f32.gmra.mxu0 %v432
        %v454 = vpop.f32.mrf.mxu0
        %v455 = vadd.f32 0.0, %v454
        %456 = vdwg.mxu0
        %v457 = vadd.f32 %v426, %v455
        %s458 = scalar_lea.vmem %s1, 48
        %v459 = vld [vmem:[%s458] sm:$0xff]
        %460 = vrot.lane.b32.xlu0 %v274, 120
        %v461 = vpop.permute.xlu0 %460
        %v463 = vsel %vm280, %v459, 0
        %v465 = vsel %vm284, %v461, 0
        %467 = vmatpush.msra.mxu0 0.0
        %468 = vmatpush.msra.mxu0 0.0
        %469 = vmatpush.msra.mxu0 0.0
        %470 = vmatpush.msra.mxu0 0.0
        %471 = vmatpush.msra.mxu0 0.0
        %472 = vmatpush.msra.mxu0 0.0
        %473 = vmatpush.msra.mxu0 0.0
        %474 = vmatpush.msra.mxu0 0.0
        %475 = vmatpush.msra.mxu0 0.0
        %476 = vmatpush.msra.mxu0 0.0
        %477 = vmatpush.msra.mxu0 0.0
        %478 = vmatpush.msra.mxu0 0.0
        %479 = vmatpush.msra.mxu0 0.0
        %480 = vmatpush.msra.mxu0 0.0
        %481 = vmatpush.msra.mxu0 0.0
        %482 = vmatpush.msra.mxu0 %v465
        %483 = vmatmul.f32.gmra.mxu0 %v463
        %v484 = vpop.f32.mrf.mxu0
        %v485 = vadd.f32 0.0, %v484
        %486 = vdwg.mxu0
        %v487 = vadd.f32 %v457, %v485
        %s488 = scalar_lea.vmem %s1, 56
        %v489 = vld [vmem:[%s488] sm:$0xff]
        %490 = vrot.lane.b32.xlu0 %v277, 120
        %v491 = vpop.permute.xlu0 %490
        %v493 = vsel %vm280, %v489, 0
        %v495 = vsel %vm284, %v491, 0
        %497 = vmatpush.msra.mxu0 0.0
        %498 = vmatpush.msra.mxu0 0.0
        %499 = vmatpush.msra.mxu0 0.0
        %500 = vmatpush.msra.mxu0 0.0
        %501 = vmatpush.msra.mxu0 0.0
        %502 = vmatpush.msra.mxu0 0.0
        %503 = vmatpush.msra.mxu0 0.0
        %504 = vmatpush.msra.mxu0 0.0
        %505 = vmatpush.msra.mxu0 0.0
        %506 = vmatpush.msra.mxu0 0.0
        %507 = vmatpush.msra.mxu0 0.0
        %508 = vmatpush.msra.mxu0 0.0
        %509 = vmatpush.msra.mxu0 0.0
        %510 = vmatpush.msra.mxu0 0.0
        %511 = vmatpush.msra.mxu0 0.0
        %512 = vmatpush.msra.mxu0 %v495
        %513 = vmatmul.f32.gmra.mxu0 %v493
        %v514 = vpop.f32.mrf.mxu0
        %v515 = vadd.f32 0.0, %v514
        %516 = vdwg.mxu0
        %v517 = vadd.f32 %v487, %v515
        %s518 = scalar_lea.vmem %s1, 64
        %v519 = vld [vmem:[%s518] sm:$0xff]
        %520 = vrot.lane.b32.xlu0 %v335, 120
        %v521 = vpop.permute.xlu0 %520
        %v523 = vsel %vm280, %v519, 0
        %v525 = vsel %vm284, %v521, 0
        %527 = vmatpush.msra.mxu0 0.0
        %528 = vmatpush.msra.mxu0 0.0
        %529 = vmatpush.msra.mxu0 0.0
        %530 = vmatpush.msra.mxu0 0.0
        %531 = vmatpush.msra.mxu0 0.0
        %532 = vmatpush.msra.mxu0 0.0
        %533 = vmatpush.msra.mxu0 0.0
        %534 = vmatpush.msra.mxu0 0.0
        %535 = vmatpush.msra.mxu0 0.0
        %536 = vmatpush.msra.mxu0 0.0
        %537 = vmatpush.msra.mxu0 0.0
        %538 = vmatpush.msra.mxu0 0.0
        %539 = vmatpush.msra.mxu0 0.0
        %540 = vmatpush.msra.mxu0 0.0
        %541 = vmatpush.msra.mxu0 0.0
        %542 = vmatpush.msra.mxu0 %v525
        %543 = vmatmul.f32.gmra.mxu0 %v523
        %v544 = vpop.f32.mrf.mxu0
        %v545 = vadd.f32 0.0, %v544
        %546 = vdwg.mxu0
        %v547 = vadd.f32 %v517, %v545
        %p548 = scmp.eq.s32.totalorder %s22, 0
        %p549 = scmp.eq.s32.totalorder %s23, 0
        %p550 = pnand %p548, %p549
        %p551 = pneg %p550
        // Predicated region
        $region78: #{tpu_custom_call.1} parent=72 // pred_check
          _
        $region79: #{tpu_custom_call.1} parent=72 // pred_check_branch
          %553 = sbr.rel (%p550) target = $region81
        $region80: #{tpu_custom_call.1} parent=72 // pred_region
          %vm554 = vcmask 7168
          %555 = vst.msk [vmem:[#allocation2] sm:$0xff] %vm554, 0.0
          %556 = vst.msk [vmem:[#allocation3] sm:$0xff] %vm554, 0.0
        $region81: #{tpu_custom_call.1} parent=72 // pred_fallthru
          _
        // Predicated region
        $region82: #{tpu_custom_call.1} parent=72 // pred_check
          %p557 = pneg %p548
        $region83: #{tpu_custom_call.1} parent=72 // pred_check_branch
          %559 = sbr.rel (%p557) target = $region85
        $region84: #{tpu_custom_call.1} parent=72 // pred_region
          %s560 = smul.u32 %s23, 64
          %s561 = scvt.s32.f32 %s560
          %s562 = sadd.f32 %s561, 64.0
          %vm563 = vcmask 523264
          %v564 = vsel %vm563, %v547, 0.0
          %565 = vadd.xlane.f32.xlu0 %v564
          %v566 = vpop.xlane.xlu0 %565
          %v567 = vrcp.pop 64.0
          %v568 = vmul.f32 64.0, %v567
          %v569 = vsub.f32 1.0, %v568
          %v570 = vmul.f32 %v567, %v569
          %v571 = vadd.f32 %v567, %v570
          %vm572 = vweird.f32 %v567
          %v573 = vsel %vm572, %v567, %v571
          %v574 = vmul.f32 %v566, %v573
          %v575 = vsub.f32 %v547, %v574
          %v576 = vmul.f32 %v575, %v575
          %v577 = vsel %vm563, %v576, 0.0
          %578 = vadd.xlane.f32.xlu0 %v577
          %v579 = vpop.xlane.xlu0 %578
          %v580 = vld [vmem:[#allocation2] sm:$0xff]
          %v581 = vsub.f32 %v574, %v580
          %v582 = vstv %s562
          %v583 = vrcp.pop %v582
          %v584 = vmul.f32 %v582, %v583
          %v585 = vsub.f32 1.0, %v584
          %v586 = vmul.f32 %v583, %v585
          %v587 = vadd.f32 %v583, %v586
          %vm588 = vweird.f32 %v582
          %vm589 = vweird.f32 %v583
          %vm590 = vmor %vm588, %vm589
          %v591 = vsel %vm590, %v583, %v587
          %v592 = vand.u32 2147483647, %v582
          %vm593 = vcmp.eq.f32.partialorder %v592, 8.507059e+37
          %v594 = vand.u32 %v582, 2147483648
          %v595 = vor.u32 1.1754944e-38, %v594
          %v596 = vsel %vm593, %v595, %v591
          %s597 = vtos %v596
          %s598 = smul.f32 64.0, %s597
          %v599 = vstv %s598
          %v600 = vmul.f32 %v581, %v599
          %v601 = vadd.f32 %v580, %v600
          %vm602 = vcmask 7168
          %603 = vst.msk [vmem:[#allocation2] sm:$0xff] %vm602, %v601
          %v604 = vld [vmem:[#allocation3] sm:$0xff]
          %v605 = vadd.f32 %v604, %v579
          %v606 = vmul.f32 %v581, %v581
          %s607 = smul.f32 %s561, 64.0
          %v608 = vstv %s562
          %v609 = vrcp.pop %v608
          %v610 = vmul.f32 %v608, %v609
          %v611 = vsub.f32 1.0, %v610
          %v612 = vmul.f32 %v609, %v611
          %v613 = vadd.f32 %v609, %v612
          %vm614 = vweird.f32 %v608
          %vm615 = vweird.f32 %v609
          %vm616 = vmor %vm614, %vm615
          %v617 = vsel %vm616, %v609, %v613
          %v618 = vand.u32 2147483647, %v608
          %vm619 = vcmp.eq.f32.partialorder %v618, 8.507059e+37
          %v620 = vand.u32 %v608, 2147483648
          %v621 = vor.u32 1.1754944e-38, %v620
          %v622 = vsel %vm619, %v621, %v617
          %s623 = vtos %v622
          %s624 = smul.f32 %s607, %s623
          %v625 = vstv %s624
          %v626 = vmul.f32 %v606, %v625
          %v627 = vadd.f32 %v605, %v626
          %628 = vst.msk [vmem:[#allocation3] sm:$0xff] %vm602, %v627
        $region85: #{tpu_custom_call.1} parent=72 // pred_fallthru
          _
        %p629 = scmp.eq.s32.totalorder %s22, 1
        // Predicated region
        $region86: #{tpu_custom_call.1} parent=72 // pred_check
          %p630 = pneg %p629
        $region87: #{tpu_custom_call.1} parent=72 // pred_check_branch
          %632 = sbr.rel (%p630) target = $region89
        $region88: #{tpu_custom_call.1} parent=72 // pred_region
          %v633 = vld [vmem:[#allocation2] sm:$0xff]
          %v634 = vld [vmem:[#allocation3] sm:$0xff]
          %v635 = vmul.f32 %v634, 0.0078125
          %v636 = vmax.f32 %v635, 0.0
          %v637 = vld [vmem:[%s2] sm:$0xff]
          %v638 = vadd.f32 %v636, 1e-05
          %v639 = vrsqrt.pop %v638
          %v640 = vmul.f32 %v639, %v638
          %v641 = vmul.f32 %v640, %v639
          %v642 = vmul.f32 0.5, %v641
          %v643 = vsub.f32 1.5, %v642
          %v644 = vmul.f32 %v639, %v643
          %vm645 = vweird.f32 %v638
          %vm646 = vweird.f32 %v639
          %vm647 = vmor %vm645, %vm646
          %v648 = vsel %vm647, %v639, %v644
          %v649 = vmul.f32 %v637, %v648
          %v650 = vld [vmem:[%s3] sm:$0xff]
          %v651 = vmul.f32 %v633, %v649
          %v652 = vsub.f32 %v650, %v651
          %654 = vset.pattern.permute.xlu0 0
          %655 = vperm.xlu0 %654, %v649
          %v656 = vpop.permute.xlu0 %655
          %v658 = vmul.f32 %v547, %v656
          %660 = vset.pattern.permute.xlu0 0
          %661 = vperm.xlu0 %660, %v652
          %v662 = vpop.permute.xlu0 %661
          %v664 = vadd.f32 %v658, %v662
          %v665 = vmax.f32 %v664, 0.0
          %vm666 = vcmask 523264
          %667 = vst.msk [vmem:[%s272] sm:$0xff] %vm666, %v665
        $region89: #{tpu_custom_call.1} parent=72 // pred_fallthru
          _
        %s668 = sand.u32 %s129, 1
        %s669 = scalar_lea.sflag [#allocation6], %s668
        %s670 = sand.u32 %s129, 1
        %s671 = smul.addr %s670, 8
        %s672 = scalar_lea.vmem [#allocation5], %s671
        // Predicated region
        $region90: #{tpu_custom_call.1} parent=72 // pred_check
          %p673 = pneg %p139
        $region91: #{tpu_custom_call.1} parent=72 // pred_check_branch
          %675 = sbr.rel (%p673) target = $region93
        $region92: #{tpu_custom_call.1} parent=72 // pred_region
          %s676 = smul.u32 %s22, %s23
          %678 = vsyncadd %s669, 0
          %s679 = smul.addr %s676, 8
          %s680 = scalar_lea.hbm %s4, %s679
          %s682 = sshll.u32 %s672, 4
          %s683 = int_to_ptr.vmem [resolvable:$true] %s682
          %s684 = sshll.u32 %s680, 4
          %s685 = int_to_ptr.hbm [resolvable:$true] %s684
          %687 = dma.vmem_to_hbm [thread:$0]  %s683, 128, %s685, %s669
        $region93: #{tpu_custom_call.1} parent=72 // pred_fallthru
          _
      $region73: #{tpu_custom_call.1} parent=5 // pred_fallthru
        _
      %p688 = scmp.le.s32.totalorder 2, %s13
      // Predicated region
      $region94: #{tpu_custom_call.1} parent=5 // pred_check
        %p689 = pneg %p688
      $region95: #{tpu_custom_call.1} parent=5 // pred_check_branch
        %691 = sbr.rel (%p689) target = $region97
      $region96: #{tpu_custom_call.1} parent=5 // pred_region
        %s692 = ssub.s32 %s13, 2
        // Predicated region
        $region98: #{tpu_custom_call.1} parent=96 // pred_check
          %p693 = pneg %p145
        $region99: #{tpu_custom_call.1} parent=96 // pred_check_branch
          %695 = sbr.rel (%p693) target = $region101
        $region100: #{tpu_custom_call.1} parent=96 // pred_region
          %s696 = sand.u32 %s130, 1
          %s697 = scalar_lea.sflag [#allocation6], %s696
          %s698 = sand.u32 %s130, 1
          %s699 = smul.addr %s698, 8
          %s700 = scalar_lea.vmem [#allocation5], %s699
          %702 = dma.done %s697, 128
        $region101: #{tpu_custom_call.1} parent=96 // pred_fallthru
          _
      $region97: #{tpu_custom_call.1} parent=5 // pred_fallthru
        _
    $region6: #{tpu_custom_call.1} parent=1 // loop_footer
      %s17 = sadd.s32 1, %s13
    $region7: #{tpu_custom_call.1} parent=1 // loop_footer_branch
      %12 = sbr.rel target = $region3
    $region8: #{tpu_custom_call.1} parent=1 // loop_exit
      _
    %703 = vsyncpa [#allocation6], 1
    %s704 = scalar_lea.sflag [#allocation6], 1
    %705 = vsyncpa %s704, 1

</llo_original>
